<compile_context>
chip_gen: v5e
topology: v5e:2x2
jax: 0.10.0
libtpu: 0.0.40
codegen_flags: <defaults>
</compile_context>

<pallas_src>
import functools

import jax
import jax.numpy as jnp
import numpy as np
from jax.experimental import pallas as pl
from jax.experimental.pallas import tpu as pltpu


def _round_up(x, m):
    return (x + m - 1) // m * m


def _gvlinear_kernel(s_ref, v_ref, w1_ref, sel_ref, wsn_ref, wss_ref,
                     wg_ref, bg_ref, w2_ref, os_ref, ov_ref):
    """One row-tile of GVLinear.

    s_ref  : (tm, S_in)         scalar features
    v_ref  : (tm, 3*C_in)       vector features, natural interleaved layout
                                (c0x, c0y, c0z, c1x, ...)
    w1_ref : (3*C_in, 3*H)      lin_vector weight with xyz folded in; output
                                columns blocked as [ix | iy | iz]
    sel_ref: (3*H, H)           xyz-summing selection matrix (tiled identity)
    wsn_ref: (H, S_out)         lin_scalar weight rows acting on the norm
    wss_ref: (S_in, S_out)      lin_scalar weight rows acting on feat_scalar
    wg_ref : (S_out, 3*V_out)   gate weight, columns replicated per xyz
    bg_ref : (1, 3*V_out)       gate bias, replicated per xyz
    w2_ref : (3*H, 3*V_out)     lin_vector2 weight; rows blocked to match
                                inter, columns xyz-interleaved (v0x, v0y, ...)
    os_ref : (tm, S_out)        out_scalar
    ov_ref : (tm, 3*V_out)      out_vector, xyz-interleaved columns
    """
    v = v_ref[...]

    # VNLinear #1 for all xyz components in one MXU pass: [ix | iy | iz].
    inter = jnp.dot(v, w1_ref[...], preferred_element_type=jnp.float32)

    # ||inter||_2 over xyz via square + selection matmul (no lane slicing).
    norm = jnp.sqrt(jnp.dot(inter * inter, sel_ref[...],
                            preferred_element_type=jnp.float32))        # (tm, H)

    # out_scalar = [norm | feat_scalar] @ Ws, done as two dots (no concat).
    out_s = (jnp.dot(norm.astype(wsn_ref.dtype), wsn_ref[...],
                     preferred_element_type=jnp.float32)
             + jnp.dot(s_ref[...], wss_ref[...],
                       preferred_element_type=jnp.float32))             # (tm, S_out)

    # Gate, already replicated across xyz so it multiplies the interleaved
    # vector output with a plain elementwise product (no lane repeat).
    gate = jax.nn.sigmoid(
        jnp.dot(out_s.astype(wg_ref.dtype), wg_ref[...],
                preferred_element_type=jnp.float32) + bg_ref[...])      # (tm, 3*V)

    # VNLinear #2 straight from inter (same associativity as the reference).
    ov = gate * jnp.dot(inter.astype(w2_ref.dtype), w2_ref[...],
                        preferred_element_type=jnp.float32)             # (tm, 3*V)

    os_ref[...] = out_s.astype(os_ref.dtype)
    ov_ref[...] = ov.astype(ov_ref.dtype)


@functools.partial(jax.jit, static_argnames=("tm",))
def gvlinear_pallas(feat_scalar, feat_vector, w1, w2, ws, wg, bg, *, tm=2048):
    """feat_scalar: [B, N, S_in]; feat_vector: [B, N, C_in, 3] (PyTorch layout).

    Weights are stored transposed ([in, out]) relative to torch.nn.Linear.
    """
    B, N, s_in = feat_scalar.shape
    _, _, c_in, three = feat_vector.shape
    assert three == 3
    M = B * N
    H = w1.shape[1]
    s_out = ws.shape[1]
    v_out = w2.shape[1]
    assert ws.shape[0] == H + s_in

    # ---- layout: both inputs are free reshapes (no HBM shuffles) -----------
    s_flat = feat_scalar.reshape(M, s_in)
    v_flat = feat_vector.reshape(M, 3 * c_in)        # xyz stays interleaved

    # ---- fold the xyz permutation into the (tiny) weights ------------------
    eye3_1 = jnp.eye(3, dtype=w1.dtype)
    eye3_2 = jnp.eye(3, dtype=w2.dtype)
    # w1_big[3c + x, yH + h] = w1[c, h] * (x == y)   -> inter cols blocked by xyz
    w1_big = jnp.einsum("ch,xy->cxyh", w1, eye3_1).reshape(3 * c_in, 3 * H)
    # sel[yH + h, h'] = (h == h')                    -> sums squares over xyz
    sel = jnp.tile(jnp.eye(H, dtype=jnp.float32), (3, 1))
    ws_norm = ws[:H, :]                              # (H, S_out)
    ws_s = ws[H:, :]                                 # (S_in, S_out)
    # w2_big[xH + h, 3v + y] = w2[h, v] * (x == y)   -> xyz-interleaved output
    w2_big = jnp.einsum("hv,xy->xhvy", w2, eye3_2).reshape(3 * H, 3 * v_out)
    wg_rep = jnp.repeat(wg, 3, axis=1)               # (S_out, 3*V_out)
    bg_rep = jnp.repeat(bg, 3, axis=1)               # (1, 3*V_out)

    # ---- row-tile sizing under an explicit VMEM working-set budget ---------
    lane = lambda c: _round_up(max(int(c), 1), 128)
    bpe_s = jnp.dtype(feat_scalar.dtype).itemsize
    bpe_v = jnp.dtype(feat_vector.dtype).itemsize
    io_row = (bpe_s * lane(s_in) + bpe_v * lane(3 * c_in)          # inputs
              + bpe_s * lane(s_out) + bpe_v * lane(3 * v_out))     # outputs
    inter_row = 8 * 4 * max(lane(3 * H), lane(s_out), lane(3 * v_out), 128)
    vmem_budget = 20 * 1024 * 1024        # 2x-buffered I/O + f32 intermediates
    tm = max(8, _round_up(int(tm), 8))
    while tm > 8 and 2 * tm * io_row + tm * inter_row > vmem_budget:
        tm = max(8, (tm // 2) // 8 * 8)
    # Keep several grid steps so v7x megacore + DMA/compute overlap engage.
    tm = min(tm, max(8, _round_up(pl.cdiv(M, 8), 8)))
    grid = (pl.cdiv(M, tm),)

    flops_per_row = 2 * (3 * c_in * 3 * H + 3 * H * H + H * s_out
                         + s_in * s_out + s_out * 3 * v_out + 3 * H * 3 * v_out)
    weight_bytes = 4 * (3 * c_in * 3 * H + 3 * H * H + (H + s_in) * s_out
                        + (s_out + 1) * 3 * v_out + 3 * H * 3 * v_out)
    cost = pl.CostEstimate(
        flops=int(M * flops_per_row),
        transcendentals=int(M * (H + 3 * v_out)),
        bytes_accessed=int(M * (bpe_s * (s_in + s_out)
                                + bpe_v * 3 * (c_in + v_out)) + weight_bytes),
    )

    out_s_flat, out_v_flat = pl.pallas_call(
        _gvlinear_kernel,
        out_shape=(
            jax.ShapeDtypeStruct((M, s_out), feat_scalar.dtype),
            jax.ShapeDtypeStruct((M, 3 * v_out), feat_vector.dtype),
        ),
        grid_spec=pltpu.PrefetchScalarGridSpec(
            num_scalar_prefetch=0,
            grid=grid,
            in_specs=[
                pl.BlockSpec((tm, s_in), lambda i: (i, 0)),
                pl.BlockSpec((tm, 3 * c_in), lambda i: (i, 0)),
                pl.BlockSpec((3 * c_in, 3 * H), lambda i: (0, 0)),
                pl.BlockSpec((3 * H, H), lambda i: (0, 0)),
                pl.BlockSpec((H, s_out), lambda i: (0, 0)),
                pl.BlockSpec((s_in, s_out), lambda i: (0, 0)),
                pl.BlockSpec((s_out, 3 * v_out), lambda i: (0, 0)),
                pl.BlockSpec((1, 3 * v_out), lambda i: (0, 0)),
                pl.BlockSpec((3 * H, 3 * v_out), lambda i: (0, 0)),
            ],
            out_specs=[
                pl.BlockSpec((tm, s_out), lambda i: (i, 0)),
                pl.BlockSpec((tm, 3 * v_out), lambda i: (i, 0)),
            ],
        ),
        compiler_params=pltpu.CompilerParams(
            dimension_semantics=("parallel",),
            vmem_limit_bytes=48 * 1024 * 1024,
        ),
        cost_estimate=cost,
    )(s_flat, v_flat, w1_big, sel, ws_norm, ws_s, wg_rep, bg_rep, w2_big)

    # ---- free reshapes back to the PyTorch layout ---------------------------
    out_s = out_s_flat.reshape(B, N, s_out)
    out_v = out_v_flat.reshape(B, N, v_out, 3)       # columns were (v, xyz)
    return out_s, out_v


def gvlinear_reference(feat_scalar, feat_vector, w1, w2, ws, wg, bg):
    """Plain-JAX reference mirroring the PyTorch forward exactly."""
    xT = jnp.swapaxes(feat_vector, -2, -1)            # [B,N,3,Cin]
    interT = xT @ w1                                   # [B,N,3,H]
    inter = jnp.swapaxes(interT, -2, -1)               # [B,N,H,3]
    norm = jnp.linalg.norm(inter, axis=-1)             # [B,N,H]
    cat = jnp.concatenate([norm, feat_scalar], axis=-1)
    out_s = cat @ ws                                    # [B,N,Sout]
    out_vT = interT @ w2                                # [B,N,3,Vout]
    out_v = jnp.swapaxes(out_vT, -2, -1)                # [B,N,Vout,3]
    gate = jax.nn.sigmoid(out_s @ wg + bg[0])[..., None]
    return out_s, gate * out_v


if __name__ == "__main__":
    # GVLinear(in_scalar=16, in_vector=8, out_scalar=32, out_vector=4)
    in_scalar, in_vector, out_scalar, out_vector = 16, 8, 32, 4
    dim_hid = max(in_vector, out_vector)                # 8
    B, N = 2, 8

    key = jax.random.PRNGKey(0)
    ks = jax.random.split(key, 7)
    # Deterministic synthetic parameters (stored transposed: [in, out]).
    w1 = jax.random.normal(ks[0], (in_vector, dim_hid), jnp.float32) * 0.2
    w2 = jax.random.normal(ks[1], (dim_hid, out_vector), jnp.float32) * 0.2
    ws = jax.random.normal(ks[2], (dim_hid + in_scalar, out_scalar),
                           jnp.float32) * 0.2
    wg = jax.random.normal(ks[3], (out_scalar, out_vector), jnp.float32) * 0.2
    bg = jax.random.normal(ks[4], (1, out_vector), jnp.float32) * 0.1

    feat_scalar = jax.random.normal(ks[5], (B, N, in_scalar), jnp.float32)
    feat_vector = jax.random.normal(ks[6], (B, N, in_vector, 3), jnp.float32)

    out_s, out_v = gvlinear_pallas(feat_scalar, feat_vector,
                                   w1, w2, ws, wg, bg)
    jax.block_until_ready((out_s, out_v))

    ref_s, ref_v = gvlinear_reference(feat_scalar, feat_vector,
                                      w1, w2, ws, wg, bg)
    np.testing.assert_allclose(np.asarray(out_s), np.asarray(ref_s),
                               rtol=1e-5, atol=1e-5)
    np.testing.assert_allclose(np.asarray(out_v), np.asarray(ref_v),
                               rtol=1e-5, atol=1e-5)
    print("KERNEL_OK")
</pallas_src>

<mosaic_0001>
module attributes {stable_mosaic.version = 11 : i64} {
  func.func @_gvlinear_kernel(%arg0: i32, %arg1: memref<8x16xf32, #tpu.memory_space<vmem>>, %arg2: memref<8x24xf32, #tpu.memory_space<vmem>>, %arg3: memref<24x24xf32, #tpu.memory_space<vmem>>, %arg4: memref<24x8xf32, #tpu.memory_space<vmem>>, %arg5: memref<8x32xf32, #tpu.memory_space<vmem>>, %arg6: memref<16x32xf32, #tpu.memory_space<vmem>>, %arg7: memref<32x12xf32, #tpu.memory_space<vmem>>, %arg8: memref<1x12xf32, #tpu.memory_space<vmem>>, %arg9: memref<24x12xf32, #tpu.memory_space<vmem>>, %arg10: memref<8x32xf32, #tpu.memory_space<vmem>>, %arg11: memref<8x12xf32, #tpu.memory_space<vmem>>) attributes {dimension_semantics = [#tpu.dimension_semantics<parallel>], iteration_bounds = array<i64: 2>, scalar_prefetch = 0 : i64, scratch_operands = 0 : i64, tpu.core_type = #tpu.core_type<tc>, window_params = [{transform_indices = @transform_0, window_bounds = array<i64: 8, 16>}, {transform_indices = @transform_1, window_bounds = array<i64: 8, 24>}, {pipeline_mode = #tpu.pipeline_mode<synchronous>, transform_indices = @transform_2, window_bounds = array<i64: 24, 24>}, {pipeline_mode = #tpu.pipeline_mode<synchronous>, transform_indices = @transform_3, window_bounds = array<i64: 24, 8>}, {pipeline_mode = #tpu.pipeline_mode<synchronous>, transform_indices = @transform_4, window_bounds = array<i64: 8, 32>}, {pipeline_mode = #tpu.pipeline_mode<synchronous>, transform_indices = @transform_5, window_bounds = array<i64: 16, 32>}, {pipeline_mode = #tpu.pipeline_mode<synchronous>, transform_indices = @transform_6, window_bounds = array<i64: 32, 12>}, {pipeline_mode = #tpu.pipeline_mode<synchronous>, transform_indices = @transform_7, window_bounds = array<i64: 1, 12>}, {pipeline_mode = #tpu.pipeline_mode<synchronous>, transform_indices = @transform_8, window_bounds = array<i64: 24, 12>}, {transform_indices = @transform_9, window_bounds = array<i64: 8, 32>}, {transform_indices = @transform_10, window_bounds = array<i64: 8, 12>}]} {
    %c0 = arith.constant 0 : index
    %c0_0 = arith.constant 0 : index
    %0 = vector.load %arg2[%c0, %c0_0] : memref<8x24xf32, #tpu.memory_space<vmem>>, vector<8x24xf32>
    %c0_1 = arith.constant 0 : index
    %c0_2 = arith.constant 0 : index
    %1 = vector.load %arg3[%c0_1, %c0_2] : memref<24x24xf32, #tpu.memory_space<vmem>>, vector<24x24xf32>
    %cst = arith.constant dense<0.000000e+00> : vector<8x24xf32>
    %2 = tpu.matmul %0, %1, %cst {dimension_numbers = #tpu.dot_dimension_numbers<[1], [0], [0], [1], [0, 0, 1, 1], [], []>} : vector<8x24xf32>, vector<24x24xf32>, vector<8x24xf32> -> vector<8x24xf32>
    %3 = arith.mulf %2, %2 : vector<8x24xf32>
    %c0_3 = arith.constant 0 : index
    %c0_4 = arith.constant 0 : index
    %4 = vector.load %arg4[%c0_3, %c0_4] : memref<24x8xf32, #tpu.memory_space<vmem>>, vector<24x8xf32>
    %cst_5 = arith.constant dense<0.000000e+00> : vector<8x8xf32>
    %5 = tpu.matmul %3, %4, %cst_5 {dimension_numbers = #tpu.dot_dimension_numbers<[1], [0], [0], [1], [0, 0, 1, 1], [], []>} : vector<8x24xf32>, vector<24x8xf32>, vector<8x8xf32> -> vector<8x8xf32>
    %6 = math.sqrt %5 : vector<8x8xf32>
    %c0_6 = arith.constant 0 : index
    %c0_7 = arith.constant 0 : index
    %7 = vector.load %arg5[%c0_6, %c0_7] : memref<8x32xf32, #tpu.memory_space<vmem>>, vector<8x32xf32>
    %cst_8 = arith.constant dense<0.000000e+00> : vector<8x32xf32>
    %8 = tpu.matmul %6, %7, %cst_8 {dimension_numbers = #tpu.dot_dimension_numbers<[1], [0], [0], [1], [0, 0, 1, 1], [], []>} : vector<8x8xf32>, vector<8x32xf32>, vector<8x32xf32> -> vector<8x32xf32>
    %c0_9 = arith.constant 0 : index
    %c0_10 = arith.constant 0 : index
    %9 = vector.load %arg1[%c0_9, %c0_10] : memref<8x16xf32, #tpu.memory_space<vmem>>, vector<8x16xf32>
    %c0_11 = arith.constant 0 : index
    %c0_12 = arith.constant 0 : index
    %10 = vector.load %arg6[%c0_11, %c0_12] : memref<16x32xf32, #tpu.memory_space<vmem>>, vector<16x32xf32>
    %cst_13 = arith.constant dense<0.000000e+00> : vector<8x32xf32>
    %11 = tpu.matmul %9, %10, %cst_13 {dimension_numbers = #tpu.dot_dimension_numbers<[1], [0], [0], [1], [0, 0, 1, 1], [], []>} : vector<8x16xf32>, vector<16x32xf32>, vector<8x32xf32> -> vector<8x32xf32>
    %12 = arith.addf %8, %11 : vector<8x32xf32>
    %c0_14 = arith.constant 0 : index
    %c0_15 = arith.constant 0 : index
    %13 = vector.load %arg7[%c0_14, %c0_15] : memref<32x12xf32, #tpu.memory_space<vmem>>, vector<32x12xf32>
    %cst_16 = arith.constant dense<0.000000e+00> : vector<8x12xf32>
    %14 = tpu.matmul %12, %13, %cst_16 {dimension_numbers = #tpu.dot_dimension_numbers<[1], [0], [0], [1], [0, 0, 1, 1], [], []>} : vector<8x32xf32>, vector<32x12xf32>, vector<8x12xf32> -> vector<8x12xf32>
    %c0_17 = arith.constant 0 : index
    %c0_18 = arith.constant 0 : index
    %15 = vector.load %arg8[%c0_17, %c0_18] : memref<1x12xf32, #tpu.memory_space<vmem>>, vector<1x12xf32>
    %16 = vector.broadcast %15 : vector<1x12xf32> to vector<8x12xf32>
    %17 = arith.addf %14, %16 : vector<8x12xf32>
    %18 = arith.negf %17 : vector<8x12xf32>
    %19 = math.exp %18 : vector<8x12xf32>
    %cst_19 = arith.constant 1.000000e+00 : f32
    %20 = vector.broadcast %cst_19 : f32 to vector<8x12xf32>
    %21 = arith.addf %20, %19 : vector<8x12xf32>
    %22 = arith.divf %20, %21 : vector<8x12xf32>
    %c0_20 = arith.constant 0 : index
    %c0_21 = arith.constant 0 : index
    %23 = vector.load %arg9[%c0_20, %c0_21] : memref<24x12xf32, #tpu.memory_space<vmem>>, vector<24x12xf32>
    %cst_22 = arith.constant dense<0.000000e+00> : vector<8x12xf32>
    %24 = tpu.matmul %2, %23, %cst_22 {dimension_numbers = #tpu.dot_dimension_numbers<[1], [0], [0], [1], [0, 0, 1, 1], [], []>} : vector<8x24xf32>, vector<24x12xf32>, vector<8x12xf32> -> vector<8x12xf32>
    %25 = arith.mulf %22, %24 : vector<8x12xf32>
    %c0_23 = arith.constant 0 : index
    %c0_24 = arith.constant 0 : index
    %26 = vector.load %arg10[%c0_23, %c0_24] : memref<8x32xf32, #tpu.memory_space<vmem>>, vector<8x32xf32>
    tpu.vector_store %arg10[%c0_23, %c0_24], %12 {strides = array<i32>} : memref<8x32xf32, #tpu.memory_space<vmem>>, vector<8x32xf32>,
    %c0_25 = arith.constant 0 : index
    %c0_26 = arith.constant 0 : index
    %27 = vector.load %arg11[%c0_25, %c0_26] : memref<8x12xf32, #tpu.memory_space<vmem>>, vector<8x12xf32>
    tpu.vector_store %arg11[%c0_25, %c0_26], %25 {strides = array<i32>} : memref<8x12xf32, #tpu.memory_space<vmem>>, vector<8x12xf32>,
    return
  }
  func.func @transform_0(%arg0: i32) -> (i32, i32) {
    %c0_i32 = arith.constant 0 : i32
    %c0_i32_0 = arith.constant 0 : i32
    return %arg0, %c0_i32 : i32, i32
  }
  func.func @transform_1(%arg0: i32) -> (i32, i32) {
    %c0_i32 = arith.constant 0 : i32
    %c0_i32_0 = arith.constant 0 : i32
    return %arg0, %c0_i32 : i32, i32
  }
  func.func @transform_2(%arg0: i32) -> (i32, i32) {
    %c0_i32 = arith.constant 0 : i32
    %c0_i32_0 = arith.constant 0 : i32
    %c0_i32_1 = arith.constant 0 : i32
    return %c0_i32, %c0_i32_0 : i32, i32
  }
  func.func @transform_3(%arg0: i32) -> (i32, i32) {
    %c0_i32 = arith.constant 0 : i32
    %c0_i32_0 = arith.constant 0 : i32
    %c0_i32_1 = arith.constant 0 : i32
    return %c0_i32, %c0_i32_0 : i32, i32
  }
  func.func @transform_4(%arg0: i32) -> (i32, i32) {
    %c0_i32 = arith.constant 0 : i32
    %c0_i32_0 = arith.constant 0 : i32
    %c0_i32_1 = arith.constant 0 : i32
    return %c0_i32, %c0_i32_0 : i32, i32
  }
  func.func @transform_5(%arg0: i32) -> (i32, i32) {
    %c0_i32 = arith.constant 0 : i32
    %c0_i32_0 = arith.constant 0 : i32
    %c0_i32_1 = arith.constant 0 : i32
    return %c0_i32, %c0_i32_0 : i32, i32
  }
  func.func @transform_6(%arg0: i32) -> (i32, i32) {
    %c0_i32 = arith.constant 0 : i32
    %c0_i32_0 = arith.constant 0 : i32
    %c0_i32_1 = arith.constant 0 : i32
    return %c0_i32, %c0_i32_0 : i32, i32
  }
  func.func @transform_7(%arg0: i32) -> (i32, i32) {
    %c0_i32 = arith.constant 0 : i32
    %c0_i32_0 = arith.constant 0 : i32
    %c0_i32_1 = arith.constant 0 : i32
    return %c0_i32, %c0_i32_0 : i32, i32
  }
  func.func @transform_8(%arg0: i32) -> (i32, i32) {
    %c0_i32 = arith.constant 0 : i32
    %c0_i32_0 = arith.constant 0 : i32
    %c0_i32_1 = arith.constant 0 : i32
    return %c0_i32, %c0_i32_0 : i32, i32
  }
  func.func @transform_9(%arg0: i32) -> (i32, i32) {
    %c0_i32 = arith.constant 0 : i32
    %c0_i32_0 = arith.constant 0 : i32
    return %arg0, %c0_i32 : i32, i32
  }
  func.func @transform_10(%arg0: i32) -> (i32, i32) {
    %c0_i32 = arith.constant 0 : i32
    %c0_i32_0 = arith.constant 0 : i32
    return %arg0, %c0_i32 : i32, i32
  }
}

</mosaic_0001>

<llo_original>
// kernel: gvlinear_pallas.1
$region0: #{gvlinear_pallas.1}
  #allocation0 [shape = 'u32[]', space=smem, size = 0x4, offset = 0x4, fixed_abs, tag = 'smem constant byte address 0x4 - core index']
  #allocation1 [shape = 'u32[72,128]{1,0:T(1,128)}', space=vmem, size = 0x9000, scoped, tag = 'internal scratch']
  %s0 = inlined_call_operand.vmem [shape: f32[16,16], index: 0, kind: input, shape index: {}]
  %s1 = inlined_call_operand.vmem [shape: f32[16,24], index: 1, kind: input, shape index: {}]
  %s2 = inlined_call_operand.vmem [shape: f32[24,24], index: 2, kind: input, shape index: {}]
  %s3 = inlined_call_operand.vmem [shape: f32[24,8], index: 3, kind: input, shape index: {}]
  %s4 = inlined_call_operand.vmem [shape: f32[8,32], index: 4, kind: input, shape index: {}]
  %s5 = inlined_call_operand.vmem [shape: f32[16,32], index: 5, kind: input, shape index: {}]
  %s6 = inlined_call_operand.vmem [shape: f32[32,12], index: 6, kind: input, shape index: {}]
  %s7 = inlined_call_operand.vmem [shape: f32[1,12], index: 7, kind: input, shape index: {}]
  %s8 = inlined_call_operand.vmem [shape: f32[24,12], index: 8, kind: input, shape index: {}]
  %s9 = inlined_call_operand.hbm [shape: f32[16,32], index: 9, kind: output, shape index: {0}]
  %s10 = inlined_call_operand.vmem [shape: f32[16,12], index: 10, kind: output, shape index: {1}]
  %11 = xla_tuple %s9, %s10
  %s12 = sld [smem:[#allocation0]]
  $region77: #{gvlinear_pallas.1} parent=0
    _
  %s14 = ssub.s32 1, %s12
  %s15 = scalar_select 0, %s14, %s12
  $region1: #{gvlinear_pallas.1} parent=0
    #allocation2 [shape = 'u8[8192]{0}', space=vmem, size = 0x2000, scoped, tag = 'output window, operand 0']
    #allocation3 [shape = 's32[2]{0}', space=sflag, size = 0x8, scoped, tag = 'scoped memory for gvlinear_pallas.1']
    %16 = vsyncpa [#allocation3], 0
    %s17 = scalar_lea.sflag [#allocation3], 1
    %18 = vsyncpa %s17, 0
    loop: start=0, step=1, limit=4
    $region2: #{gvlinear_pallas.1} parent=1 // loop_pre_header
      _
    $region3: #{gvlinear_pallas.1} parent=1 // loop_header
      %s20 = sphi 0, %s24
      %p21 = scmp.ge.s32.totalorder %s20, 4
      %s30 = sphi 0, %s32
      %s33 = sphi 0, %s30
      %s34 = sphi 0, %s33
      %s50 = sphi 0, %s34
      %s56 = sphi 0, %s58
      %s59 = sphi 0, %s56
      %s60 = sphi 0, %s59
      %s76 = sphi 0, %s60
      %s80 = sphi 0, %s80
      %s82 = sphi 0, %s80
      %s83 = sphi 0, %s82
      %s97 = sphi 0, %s83
      %s101 = sphi 0, %s101
      %s103 = sphi 0, %s101
      %s104 = sphi 0, %s103
      %s118 = sphi 0, %s104
      %s122 = sphi 0, %s122
      %s124 = sphi 0, %s122
      %s125 = sphi 0, %s124
      %s139 = sphi 0, %s125
      %s143 = sphi 0, %s143
      %s145 = sphi 0, %s143
      %s146 = sphi 0, %s145
      %s160 = sphi 0, %s146
      %s164 = sphi 0, %s164
      %s166 = sphi 0, %s164
      %s167 = sphi 0, %s166
      %s181 = sphi 0, %s167
      %s185 = sphi 0, %s185
      %s187 = sphi 0, %s185
      %s188 = sphi 0, %s187
      %s202 = sphi 0, %s188
      %s206 = sphi 0, %s206
      %s208 = sphi 0, %s206
      %s209 = sphi 0, %s208
      %s223 = sphi 0, %s209
      %s229 = sphi 0, %s231
      %s232 = sphi 0, %s229
      %s233 = sphi 0, %s232
      %s249 = sphi 0, %s233
      %s255 = sphi 0, %s257
      %s258 = sphi 0, %s255
      %s259 = sphi 0, %s258
      %s275 = sphi 0, %s259
    $region4: #{gvlinear_pallas.1} parent=1 // loop_header_branch
      %23 = sbr.rel (%p21) target = $region8
    $region5: #{gvlinear_pallas.1} parent=1 // loop_body
      %s25 = ssub.s32 %s20, 1
      %s26 = ssub.s32 %s20, 2
      %s27 = sadd.s32 %s20, 1
      %s28 = ssub.s32 %s20, %s27
      %p29 = scmp.eq.s32.totalorder %s28, 0
      %s31 = sadd.s32 %s30, 1
      %s32 = scalar_select %p29, %s30, %s31
      %p35 = pneg %p29
      %p36 = scmp.eq.s32.totalorder %s20, 1
      %p37 = por %p35, %p36
      %p38 = scmp.ne.s32.totalorder %s30, %s33
      %p39 = scmp.eq.s32.totalorder %s20, 0
      %p40 = por %p38, %p39
      %p41 = scmp.ne.s32.totalorder %s30, %s33
      %p42 = scmp.eq.s32.totalorder %s25, 1
      %p43 = por %p41, %p42
      %p44 = scmp.ne.s32.totalorder %s33, %s34
      %p45 = scmp.eq.s32.totalorder %s25, 0
      %p46 = por %p44, %p45
      %p47 = scmp.ne.s32.totalorder %s33, %s34
      %p48 = scmp.eq.s32.totalorder %s26, 1
      %p49 = por %p47, %p48
      %p51 = scmp.ne.s32.totalorder %s34, %s50
      %p52 = scmp.eq.s32.totalorder %s26, 0
      %p53 = por %p51, %p52
      %s54 = ssub.s32 %s20, %s27
      %p55 = scmp.eq.s32.totalorder %s54, 0
      %s57 = sadd.s32 %s56, 1
      %s58 = scalar_select %p55, %s56, %s57
      %p61 = pneg %p55
      %p62 = scmp.eq.s32.totalorder %s20, 1
      %p63 = por %p61, %p62
      %p64 = scmp.ne.s32.totalorder %s56, %s59
      %p65 = scmp.eq.s32.totalorder %s20, 0
      %p66 = por %p64, %p65
      %p67 = scmp.ne.s32.totalorder %s56, %s59
      %p68 = scmp.eq.s32.totalorder %s25, 1
      %p69 = por %p67, %p68
      %p70 = scmp.ne.s32.totalorder %s59, %s60
      %p71 = scmp.eq.s32.totalorder %s25, 0
      %p72 = por %p70, %p71
      %p73 = scmp.ne.s32.totalorder %s59, %s60
      %p74 = scmp.eq.s32.totalorder %s26, 1
      %p75 = por %p73, %p74
      %p77 = scmp.ne.s32.totalorder %s60, %s76
      %p78 = scmp.eq.s32.totalorder %s26, 0
      %p79 = por %p77, %p78
      %s81 = sadd.s32 %s80, 1
      %p84 = scmp.eq.s32.totalorder %s20, 1
      %p85 = scmp.ne.s32.totalorder %s80, %s82
      %p86 = scmp.eq.s32.totalorder %s20, 0
      %p87 = por %p85, %p86
      %p88 = scmp.ne.s32.totalorder %s80, %s82
      %p89 = scmp.eq.s32.totalorder %s25, 1
      %p90 = por %p88, %p89
      %p91 = scmp.ne.s32.totalorder %s82, %s83
      %p92 = scmp.eq.s32.totalorder %s25, 0
      %p93 = por %p91, %p92
      %p94 = scmp.ne.s32.totalorder %s82, %s83
      %p95 = scmp.eq.s32.totalorder %s26, 1
      %p96 = por %p94, %p95
      %p98 = scmp.ne.s32.totalorder %s83, %s97
      %p99 = scmp.eq.s32.totalorder %s26, 0
      %p100 = por %p98, %p99
      %s102 = sadd.s32 %s101, 1
      %p105 = scmp.eq.s32.totalorder %s20, 1
      %p106 = scmp.ne.s32.totalorder %s101, %s103
      %p107 = scmp.eq.s32.totalorder %s20, 0
      %p108 = por %p106, %p107
      %p109 = scmp.ne.s32.totalorder %s101, %s103
      %p110 = scmp.eq.s32.totalorder %s25, 1
      %p111 = por %p109, %p110
      %p112 = scmp.ne.s32.totalorder %s103, %s104
      %p113 = scmp.eq.s32.totalorder %s25, 0
      %p114 = por %p112, %p113
      %p115 = scmp.ne.s32.totalorder %s103, %s104
      %p116 = scmp.eq.s32.totalorder %s26, 1
      %p117 = por %p115, %p116
      %p119 = scmp.ne.s32.totalorder %s104, %s118
      %p120 = scmp.eq.s32.totalorder %s26, 0
      %p121 = por %p119, %p120
      %s123 = sadd.s32 %s122, 1
      %p126 = scmp.eq.s32.totalorder %s20, 1
      %p127 = scmp.ne.s32.totalorder %s122, %s124
      %p128 = scmp.eq.s32.totalorder %s20, 0
      %p129 = por %p127, %p128
      %p130 = scmp.ne.s32.totalorder %s122, %s124
      %p131 = scmp.eq.s32.totalorder %s25, 1
      %p132 = por %p130, %p131
      %p133 = scmp.ne.s32.totalorder %s124, %s125
      %p134 = scmp.eq.s32.totalorder %s25, 0
      %p135 = por %p133, %p134
      %p136 = scmp.ne.s32.totalorder %s124, %s125
      %p137 = scmp.eq.s32.totalorder %s26, 1
      %p138 = por %p136, %p137
      %p140 = scmp.ne.s32.totalorder %s125, %s139
      %p141 = scmp.eq.s32.totalorder %s26, 0
      %p142 = por %p140, %p141
      %s144 = sadd.s32 %s143, 1
      %p147 = scmp.eq.s32.totalorder %s20, 1
      %p148 = scmp.ne.s32.totalorder %s143, %s145
      %p149 = scmp.eq.s32.totalorder %s20, 0
      %p150 = por %p148, %p149
      %p151 = scmp.ne.s32.totalorder %s143, %s145
      %p152 = scmp.eq.s32.totalorder %s25, 1
      %p153 = por %p151, %p152
      %p154 = scmp.ne.s32.totalorder %s145, %s146
      %p155 = scmp.eq.s32.totalorder %s25, 0
      %p156 = por %p154, %p155
      %p157 = scmp.ne.s32.totalorder %s145, %s146
      %p158 = scmp.eq.s32.totalorder %s26, 1
      %p159 = por %p157, %p158
      %p161 = scmp.ne.s32.totalorder %s146, %s160
      %p162 = scmp.eq.s32.totalorder %s26, 0
      %p163 = por %p161, %p162
      %s165 = sadd.s32 %s164, 1
      %p168 = scmp.eq.s32.totalorder %s20, 1
      %p169 = scmp.ne.s32.totalorder %s164, %s166
      %p170 = scmp.eq.s32.totalorder %s20, 0
      %p171 = por %p169, %p170
      %p172 = scmp.ne.s32.totalorder %s164, %s166
      %p173 = scmp.eq.s32.totalorder %s25, 1
      %p174 = por %p172, %p173
      %p175 = scmp.ne.s32.totalorder %s166, %s167
      %p176 = scmp.eq.s32.totalorder %s25, 0
      %p177 = por %p175, %p176
      %p178 = scmp.ne.s32.totalorder %s166, %s167
      %p179 = scmp.eq.s32.totalorder %s26, 1
      %p180 = por %p178, %p179
      %p182 = scmp.ne.s32.totalorder %s167, %s181
      %p183 = scmp.eq.s32.totalorder %s26, 0
      %p184 = por %p182, %p183
      %s186 = sadd.s32 %s185, 1
      %p189 = scmp.eq.s32.totalorder %s20, 1
      %p190 = scmp.ne.s32.totalorder %s185, %s187
      %p191 = scmp.eq.s32.totalorder %s20, 0
      %p192 = por %p190, %p191
      %p193 = scmp.ne.s32.totalorder %s185, %s187
      %p194 = scmp.eq.s32.totalorder %s25, 1
      %p195 = por %p193, %p194
      %p196 = scmp.ne.s32.totalorder %s187, %s188
      %p197 = scmp.eq.s32.totalorder %s25, 0
      %p198 = por %p196, %p197
      %p199 = scmp.ne.s32.totalorder %s187, %s188
      %p200 = scmp.eq.s32.totalorder %s26, 1
      %p201 = por %p199, %p200
      %p203 = scmp.ne.s32.totalorder %s188, %s202
      %p204 = scmp.eq.s32.totalorder %s26, 0
      %p205 = por %p203, %p204
      %s207 = sadd.s32 %s206, 1
      %p210 = scmp.eq.s32.totalorder %s20, 1
      %p211 = scmp.ne.s32.totalorder %s206, %s208
      %p212 = scmp.eq.s32.totalorder %s20, 0
      %p213 = por %p211, %p212
      %p214 = scmp.ne.s32.totalorder %s206, %s208
      %p215 = scmp.eq.s32.totalorder %s25, 1
      %p216 = por %p214, %p215
      %p217 = scmp.ne.s32.totalorder %s208, %s209
      %p218 = scmp.eq.s32.totalorder %s25, 0
      %p219 = por %p217, %p218
      %p220 = scmp.ne.s32.totalorder %s208, %s209
      %p221 = scmp.eq.s32.totalorder %s26, 1
      %p222 = por %p220, %p221
      %p224 = scmp.ne.s32.totalorder %s209, %s223
      %p225 = scmp.eq.s32.totalorder %s26, 0
      %p226 = por %p224, %p225
      %s227 = ssub.s32 %s20, %s27
      %p228 = scmp.eq.s32.totalorder %s227, 0
      %s230 = sadd.s32 %s229, 1
      %s231 = scalar_select %p228, %s229, %s230
      %p234 = pneg %p228
      %p235 = scmp.eq.s32.totalorder %s20, 1
      %p236 = por %p234, %p235
      %p237 = scmp.ne.s32.totalorder %s229, %s232
      %p238 = scmp.eq.s32.totalorder %s20, 0
      %p239 = por %p237, %p238
      %p240 = scmp.ne.s32.totalorder %s229, %s232
      %p241 = scmp.eq.s32.totalorder %s25, 1
      %p242 = por %p240, %p241
      %p243 = scmp.ne.s32.totalorder %s232, %s233
      %p244 = scmp.eq.s32.totalorder %s25, 0
      %p245 = por %p243, %p244
      %p246 = scmp.ne.s32.totalorder %s232, %s233
      %p247 = scmp.eq.s32.totalorder %s26, 1
      %p248 = por %p246, %p247
      %p250 = scmp.ne.s32.totalorder %s233, %s249
      %p251 = scmp.eq.s32.totalorder %s26, 0
      %p252 = por %p250, %p251
      %s253 = ssub.s32 %s20, %s27
      %p254 = scmp.eq.s32.totalorder %s253, 0
      %s256 = sadd.s32 %s255, 1
      %s257 = scalar_select %p254, %s255, %s256
      %p260 = pneg %p254
      %p261 = scmp.eq.s32.totalorder %s20, 1
      %p262 = por %p260, %p261
      %p263 = scmp.ne.s32.totalorder %s255, %s258
      %p264 = scmp.eq.s32.totalorder %s20, 0
      %p265 = por %p263, %p264
      %p266 = scmp.ne.s32.totalorder %s255, %s258
      %p267 = scmp.eq.s32.totalorder %s25, 1
      %p268 = por %p266, %p267
      %p269 = scmp.ne.s32.totalorder %s258, %s259
      %p270 = scmp.eq.s32.totalorder %s25, 0
      %p271 = por %p269, %p270
      %p272 = scmp.ne.s32.totalorder %s258, %s259
      %p273 = scmp.eq.s32.totalorder %s26, 1
      %p274 = por %p272, %p273
      %p276 = scmp.ne.s32.totalorder %s259, %s275
      %p277 = scmp.eq.s32.totalorder %s26, 0
      %p278 = por %p276, %p277
      %p279 = scmp.le.s32.totalorder 1, %s20
      %p280 = scmp.lt.s32.totalorder %s20, 3
      %p281 = pnand %p279, %p280
      %p282 = pneg %p281
      // Predicated region
      $region9: #{gvlinear_pallas.1} parent=5 // pred_check
        _
      $region10: #{gvlinear_pallas.1} parent=5 // pred_check_branch
        %284 = sbr.rel (%p281) target = $region12
      $region11: #{gvlinear_pallas.1} parent=5 // pred_region
        %s285 = ssub.s32 %s20, 1
        // Predicated region
        $region13: #{gvlinear_pallas.1} parent=11 // pred_check
          %p286 = pneg %p93
        $region14: #{gvlinear_pallas.1} parent=11 // pred_check_branch
          %288 = sbr.rel (%p286) target = $region16
        $region15: #{gvlinear_pallas.1} parent=11 // pred_region
          _
        $region16: #{gvlinear_pallas.1} parent=11 // pred_fallthru
          _
        // Predicated region
        $region17: #{gvlinear_pallas.1} parent=11 // pred_check
          %p289 = pneg %p114
        $region18: #{gvlinear_pallas.1} parent=11 // pred_check_branch
          %291 = sbr.rel (%p289) target = $region20
        $region19: #{gvlinear_pallas.1} parent=11 // pred_region
          _
        $region20: #{gvlinear_pallas.1} parent=11 // pred_fallthru
          _
        // Predicated region
        $region21: #{gvlinear_pallas.1} parent=11 // pred_check
          %p292 = pneg %p135
        $region22: #{gvlinear_pallas.1} parent=11 // pred_check_branch
          %294 = sbr.rel (%p292) target = $region24
        $region23: #{gvlinear_pallas.1} parent=11 // pred_region
          _
        $region24: #{gvlinear_pallas.1} parent=11 // pred_fallthru
          _
        // Predicated region
        $region25: #{gvlinear_pallas.1} parent=11 // pred_check
          %p295 = pneg %p156
        $region26: #{gvlinear_pallas.1} parent=11 // pred_check_branch
          %297 = sbr.rel (%p295) target = $region28
        $region27: #{gvlinear_pallas.1} parent=11 // pred_region
          _
        $region28: #{gvlinear_pallas.1} parent=11 // pred_fallthru
          _
        // Predicated region
        $region29: #{gvlinear_pallas.1} parent=11 // pred_check
          %p298 = pneg %p177
        $region30: #{gvlinear_pallas.1} parent=11 // pred_check_branch
          %300 = sbr.rel (%p298) target = $region32
        $region31: #{gvlinear_pallas.1} parent=11 // pred_region
          _
        $region32: #{gvlinear_pallas.1} parent=11 // pred_fallthru
          _
        // Predicated region
        $region33: #{gvlinear_pallas.1} parent=11 // pred_check
          %p301 = pneg %p198
        $region34: #{gvlinear_pallas.1} parent=11 // pred_check_branch
          %303 = sbr.rel (%p301) target = $region36
        $region35: #{gvlinear_pallas.1} parent=11 // pred_region
          _
        $region36: #{gvlinear_pallas.1} parent=11 // pred_fallthru
          _
        // Predicated region
        $region37: #{gvlinear_pallas.1} parent=11 // pred_check
          %p304 = pneg %p219
        $region38: #{gvlinear_pallas.1} parent=11 // pred_check_branch
          %306 = sbr.rel (%p304) target = $region40
        $region39: #{gvlinear_pallas.1} parent=11 // pred_region
          _
        $region40: #{gvlinear_pallas.1} parent=11 // pred_fallthru
          _
      $region12: #{gvlinear_pallas.1} parent=5 // pred_fallthru
        _
      %p307 = scmp.lt.s32.totalorder %s20, 2
      // Predicated region
      $region41: #{gvlinear_pallas.1} parent=5 // pred_check
        %p308 = pneg %p307
      $region42: #{gvlinear_pallas.1} parent=5 // pred_check_branch
        %310 = sbr.rel (%p308) target = $region44
      $region43: #{gvlinear_pallas.1} parent=5 // pred_region
        // Predicated region
        $region45: #{gvlinear_pallas.1} parent=43 // pred_check
          %p311 = pneg %p40
        $region46: #{gvlinear_pallas.1} parent=43 // pred_check_branch
          %313 = sbr.rel (%p311) target = $region48
        $region47: #{gvlinear_pallas.1} parent=43 // pred_region
          %p314 = scmp.lt.s32.totalorder %s20, 1
          %s315 = scalar_select %p314, %s20, 1
          %s316 = smul.addr %s315, 8
          %s317 = scalar_lea.vmem %s0, %s316
        $region48: #{gvlinear_pallas.1} parent=43 // pred_fallthru
          _
        // Predicated region
        $region49: #{gvlinear_pallas.1} parent=43 // pred_check
          %p318 = pneg %p66
        $region50: #{gvlinear_pallas.1} parent=43 // pred_check_branch
          %320 = sbr.rel (%p318) target = $region52
        $region51: #{gvlinear_pallas.1} parent=43 // pred_region
          %p321 = scmp.lt.s32.totalorder %s20, 1
          %s322 = scalar_select %p321, %s20, 1
          %s323 = smul.addr %s322, 8
          %s324 = scalar_lea.vmem %s1, %s323
        $region52: #{gvlinear_pallas.1} parent=43 // pred_fallthru
          _
      $region44: #{gvlinear_pallas.1} parent=5 // pred_fallthru
        _
      %p325 = scmp.le.s32.totalorder 1, %s20
      %p326 = scmp.lt.s32.totalorder %s20, 3
      %p327 = pnand %p325, %p326
      %p328 = pneg %p327
      // Predicated region
      $region53: #{gvlinear_pallas.1} parent=5 // pred_check
        _
      $region54: #{gvlinear_pallas.1} parent=5 // pred_check_branch
        %330 = sbr.rel (%p327) target = $region56
      $region55: #{gvlinear_pallas.1} parent=5 // pred_region
        %s331 = ssub.s32 %s20, 1
        %p332 = scmp.lt.s32.totalorder %s25, 1
        %s333 = scalar_select %p332, %s25, 1
        %s334 = smul.addr %s333, 8
        %s335 = scalar_lea.vmem %s0, %s334
        %p336 = pneg %p46
        %p337 = pneg %p43
        %p338 = scmp.lt.s32.totalorder %s25, 1
        %s339 = scalar_select %p338, %s25, 1
        %s340 = smul.addr %s339, 8
        %s341 = scalar_lea.vmem %s1, %s340
        %p342 = pneg %p72
        %p343 = pneg %p69
        %p344 = pneg %p93
        %p345 = pneg %p90
        %p346 = pneg %p114
        %p347 = pneg %p111
        %p348 = pneg %p135
        %p349 = pneg %p132
        %p350 = pneg %p156
        %p351 = pneg %p153
        %p352 = pneg %p177
        %p353 = pneg %p174
        %p354 = pneg %p198
        %p355 = pneg %p195
        %p356 = pneg %p219
        %p357 = pneg %p216
        %p358 = pneg %p245
        %p359 = pneg %p242
        %s360 = sand.u32 %s232, 1
        %s361 = scalar_lea.sflag [#allocation3], %s360
        %s362 = sand.u32 %s232, 1
        %s363 = smul.addr %s362, 8
        %s364 = scalar_lea.vmem [#allocation2], %s363
        %p365 = pneg %p271
        %p366 = pneg %p268
        %p367 = scmp.lt.s32.totalorder %s25, 1
        %s368 = scalar_select %p367, %s25, 1
        %s369 = smul.addr %s368, 8
        %s370 = scalar_lea.vmem %s10, %s369
        %p371 = scmp.lt.s32.totalorder %s25, 1
        %s372 = scalar_select %p371, %s25, 1
        %s373 = smul.addr %s372, 8
        %s374 = scalar_lea.vmem %s0, %s373
        %p375 = scmp.lt.s32.totalorder %s25, 1
        %s376 = scalar_select %p375, %s25, 1
        %s377 = smul.addr %s376, 8
        %s378 = scalar_lea.vmem %s1, %s377
        %p379 = scmp.lt.s32.totalorder %s25, 1
        %s380 = scalar_select %p379, %s25, 1
        %s381 = smul.addr %s380, 8
        %s382 = scalar_lea.vmem %s10, %s381
        %v383 = vld [vmem:[%s378] sm:$0xff]
        %v384 = vld [vmem:[%s2] sm:$0xff]
        %v385 = vld [vmem:[%s2 + $0x8] sm:$0xff]
        %v386 = vld [vmem:[%s2 + $0x10] sm:$0xff]
        %vm387 = vcmask 195584
        %v389 = vsel %vm387, %v383, 0
        %391 = vmatpush.msra.mxu0 0.0
        %392 = vmatpush.msra.mxu0 0.0
        %393 = vmatpush.msra.mxu0 0.0
        %394 = vmatpush.msra.mxu0 0.0
        %395 = vmatpush.msra.mxu0 0.0
        %396 = vmatpush.msra.mxu0 0.0
        %397 = vmatpush.msra.mxu0 0.0
        %398 = vmatpush.msra.mxu0 0.0
        %399 = vmatpush.msra.mxu0 0.0
        %400 = vmatpush.msra.mxu0 0.0
        %401 = vmatpush.msra.mxu0 0.0
        %402 = vmatpush.msra.mxu0 0.0
        %403 = vmatpush.msra.mxu0 0.0
        %404 = vmatpush.msra.mxu0 %v386
        %405 = vmatpush.msra.mxu0 %v385
        %406 = vmatpush.msra.mxu0 %v384
        %407 = vmatmul.f32.gmra.mxu0 %v389
        %v408 = vpop.f32.mrf.mxu0
        %v409 = vadd.f32 0.0, %v408
        %410 = vdwg.mxu0
        %v411 = vmul.f32 %v409, %v409
        %v412 = vld [vmem:[%s3] sm:$0xff]
        %v413 = vld [vmem:[%s3 + $0x8] sm:$0xff]
        %v414 = vld [vmem:[%s3 + $0x10] sm:$0xff]
        %v416 = vsel %vm387, %v411, 0
        %418 = vmatpush.msra.mxu0 0.0
        %419 = vmatpush.msra.mxu0 0.0
        %420 = vmatpush.msra.mxu0 0.0
        %421 = vmatpush.msra.mxu0 0.0
        %422 = vmatpush.msra.mxu0 0.0
        %423 = vmatpush.msra.mxu0 0.0
        %424 = vmatpush.msra.mxu0 0.0
        %425 = vmatpush.msra.mxu0 0.0
        %426 = vmatpush.msra.mxu0 0.0
        %427 = vmatpush.msra.mxu0 0.0
        %428 = vmatpush.msra.mxu0 0.0
        %429 = vmatpush.msra.mxu0 0.0
        %430 = vmatpush.msra.mxu0 0.0
        %431 = vmatpush.msra.mxu0 %v414
        %432 = vmatpush.msra.mxu0 %v413
        %433 = vmatpush.msra.mxu0 %v412
        %434 = vmatmul.f32.gmra.mxu0 %v416
        %v435 = vpop.f32.mrf.mxu0
        %v436 = vadd.f32 0.0, %v435
        %437 = vdwg.mxu0
        %v438 = vrsqrt.pop %v436
        %v439 = vmul.f32 %v438, %v436
        %v440 = vmul.f32 %v439, %v438
        %v441 = vmul.f32 0.5, %v440
        %v442 = vsub.f32 1.5, %v441
        %v443 = vmul.f32 %v438, %v442
        %v444 = vmul.f32 %v436, %v443
        %vm445 = vcmp.eq.f32.partialorder %v436, inf
        %v446 = vsel %vm445, %v436, %v444
        %vm447 = vcmp.eq.f32.partialorder %v436, 0.0
        %v448 = vand.u32 %v436, 2147483648
        %v449 = vsel %vm447, %v448, %v446
        %v450 = vld [vmem:[%s4] sm:$0xff]
        %v451 = vld [vmem:[%s374] sm:$0xff]
        %v452 = vld [vmem:[%s5] sm:$0xff]
        %v453 = vld [vmem:[%s5 + $0x8] sm:$0xff]
        %vm454 = vcmask 130048
        %v456 = vsel %vm454, %v451, 0
        %458 = vmatpush.msra.mxu0 0.0
        %459 = vmatpush.msra.mxu0 0.0
        %460 = vmatpush.msra.mxu0 0.0
        %461 = vmatpush.msra.mxu0 0.0
        %462 = vmatpush.msra.mxu0 0.0
        %463 = vmatpush.msra.mxu0 0.0
        %464 = vmatpush.msra.mxu0 0.0
        %465 = vmatpush.msra.mxu0 0.0
        %466 = vmatpush.msra.mxu0 0.0
        %467 = vmatpush.msra.mxu0 0.0
        %468 = vmatpush.msra.mxu0 0.0
        %469 = vmatpush.msra.mxu0 0.0
        %470 = vmatpush.msra.mxu0 0.0
        %471 = vmatpush.msra.mxu0 0.0
        %472 = vmatpush.msra.mxu0 %v453
        %473 = vmatpush.msra.mxu0 %v452
        %474 = vmatmul.f32.gmra.mxu0 %v456
        %v475 = vpop.f32.mrf.mxu0
        %v476 = vadd.f32 0.0, %v475
        %477 = vdwg.mxu0
        %vm478 = vcmask 64512
        %v480 = vsel %vm478, %v449, 0
        %482 = vmatpush.msra.mxu0 0.0
        %483 = vmatpush.msra.mxu0 0.0
        %484 = vmatpush.msra.mxu0 0.0
        %485 = vmatpush.msra.mxu0 0.0
        %486 = vmatpush.msra.mxu0 0.0
        %487 = vmatpush.msra.mxu0 0.0
        %488 = vmatpush.msra.mxu0 0.0
        %489 = vmatpush.msra.mxu0 0.0
        %490 = vmatpush.msra.mxu0 0.0
        %491 = vmatpush.msra.mxu0 0.0
        %492 = vmatpush.msra.mxu0 0.0
        %493 = vmatpush.msra.mxu0 0.0
        %494 = vmatpush.msra.mxu0 0.0
        %495 = vmatpush.msra.mxu0 0.0
        %496 = vmatpush.msra.mxu0 0.0
        %497 = vmatpush.msra.mxu0 %v450
        %498 = vmatmul.f32.gmra.mxu0 %v480
        %v499 = vpop.f32.mrf.mxu0
        %v500 = vadd.f32 %v476, %v499
        %501 = vdwg.mxu0
        %v502 = vld [vmem:[%s6] sm:$0xff]
        %v503 = vld [vmem:[%s6 + $0x8] sm:$0xff]
        %v504 = vld [vmem:[%s6 + $0x10] sm:$0xff]
        %v505 = vld [vmem:[%s6 + $0x18] sm:$0xff]
        %v506 = vld [vmem:[%s7] sm:$0x1]
        %v508 = vperm.slane %v506, 0
        %vm510 = vcmask 261120
        %v512 = vsel %vm510, %v500, 0
        %514 = vmatpush.msra.mxu0 0.0
        %515 = vmatpush.msra.mxu0 0.0
        %516 = vmatpush.msra.mxu0 0.0
        %517 = vmatpush.msra.mxu0 0.0
        %518 = vmatpush.msra.mxu0 0.0
        %519 = vmatpush.msra.mxu0 0.0
        %520 = vmatpush.msra.mxu0 0.0
        %521 = vmatpush.msra.mxu0 0.0
        %522 = vmatpush.msra.mxu0 0.0
        %523 = vmatpush.msra.mxu0 0.0
        %524 = vmatpush.msra.mxu0 0.0
        %525 = vmatpush.msra.mxu0 0.0
        %526 = vmatpush.msra.mxu0 %v505
        %527 = vmatpush.msra.mxu0 %v504
        %528 = vmatpush.msra.mxu0 %v503
        %529 = vmatpush.msra.mxu0 %v502
        %530 = vmatmul.f32.gmra.mxu0 %v512
        %v531 = vpop.f32.mrf.mxu0
        %v532 = vadd.f32 %v508, %v531
        %533 = vdwg.mxu0
        %v534 = vxor.u32 %v532, 2147483648
        %v535 = vmul.f32 %v534, 1.442695
        %v536 = vpow.pop %v535
        %v537 = vadd.f32 %v536, 1.0
        %v538 = vrcp.pop %v537
        %v539 = vmul.f32 %v537, %v538
        %v540 = vsub.f32 1.0, %v539
        %v541 = vmul.f32 %v538, %v540
        %v542 = vadd.f32 %v538, %v541
        %vm543 = vweird.f32 %v537
        %vm544 = vweird.f32 %v538
        %vm545 = vmor %vm543, %vm544
        %v546 = vsel %vm545, %v538, %v542
        %v547 = vand.u32 2147483647, %v537
        %vm548 = vcmp.eq.f32.partialorder %v547, 8.507059e+37
        %v549 = vand.u32 %v537, 2147483648
        %v550 = vor.u32 1.1754944e-38, %v549
        %v551 = vsel %vm548, %v550, %v546
        %v552 = vmul.f32 1.0, %v551
        %v553 = vld [vmem:[%s8] sm:$0xff]
        %v554 = vld [vmem:[%s8 + $0x8] sm:$0xff]
        %v555 = vld [vmem:[%s8 + $0x10] sm:$0xff]
        %v557 = vsel %vm387, %v409, 0
        %559 = vmatpush.msra.mxu0 0.0
        %560 = vmatpush.msra.mxu0 0.0
        %561 = vmatpush.msra.mxu0 0.0
        %562 = vmatpush.msra.mxu0 0.0
        %563 = vmatpush.msra.mxu0 0.0
        %564 = vmatpush.msra.mxu0 0.0
        %565 = vmatpush.msra.mxu0 0.0
        %566 = vmatpush.msra.mxu0 0.0
        %567 = vmatpush.msra.mxu0 0.0
        %568 = vmatpush.msra.mxu0 0.0
        %569 = vmatpush.msra.mxu0 0.0
        %570 = vmatpush.msra.mxu0 0.0
        %571 = vmatpush.msra.mxu0 0.0
        %572 = vmatpush.msra.mxu0 %v555
        %573 = vmatpush.msra.mxu0 %v554
        %574 = vmatpush.msra.mxu0 %v553
        %575 = vmatmul.f32.gmra.mxu0 %v557
        %v576 = vpop.f32.mrf.mxu0
        %v577 = vadd.f32 0.0, %v576
        %578 = vdwg.mxu0
        %v579 = vmul.f32 %v552, %v577
        %580 = vst.msk [vmem:[%s364] sm:$0xff] %vm510, %v500
        %vm581 = vcmask 97280
        %582 = vst.msk [vmem:[%s382] sm:$0xff] %vm581, %v579
        %s583 = sand.u32 %s232, 1
        %s584 = scalar_lea.sflag [#allocation3], %s583
        %s585 = sand.u32 %s232, 1
        %s586 = smul.addr %s585, 8
        %s587 = scalar_lea.vmem [#allocation2], %s586
        %p588 = scmp.lt.s32.totalorder %s25, 1
        %s589 = scalar_select %p588, %s25, 1
        %s590 = smul.addr %s589, 8
        %s591 = scalar_lea.vmem %s10, %s590
        // Predicated region
        $region57: #{gvlinear_pallas.1} parent=55 // pred_check
          %p592 = pneg %p242
        $region58: #{gvlinear_pallas.1} parent=55 // pred_check_branch
          %594 = sbr.rel (%p592) target = $region60
        $region59: #{gvlinear_pallas.1} parent=55 // pred_region
          %596 = vsyncadd %s584, 0
          %s597 = smul.addr %s25, 8
          %s598 = scalar_lea.hbm %s9, %s597
          %s600 = sshll.u32 %s587, 4
          %s601 = int_to_ptr.vmem [resolvable:$true] %s600
          %s602 = sshll.u32 %s598, 4
          %s603 = int_to_ptr.hbm [resolvable:$true] %s602
          %605 = dma.vmem_to_hbm [thread:$0]  %s601, 128, %s603, %s584
        $region60: #{gvlinear_pallas.1} parent=55 // pred_fallthru
          _
        // Predicated region
        $region61: #{gvlinear_pallas.1} parent=55 // pred_check
          %p606 = pneg %p268
        $region62: #{gvlinear_pallas.1} parent=55 // pred_check_branch
          %608 = sbr.rel (%p606) target = $region64
        $region63: #{gvlinear_pallas.1} parent=55 // pred_region
          _
        $region64: #{gvlinear_pallas.1} parent=55 // pred_fallthru
          _
      $region56: #{gvlinear_pallas.1} parent=5 // pred_fallthru
        _
      %p609 = scmp.le.s32.totalorder 2, %s20
      // Predicated region
      $region65: #{gvlinear_pallas.1} parent=5 // pred_check
        %p610 = pneg %p609
      $region66: #{gvlinear_pallas.1} parent=5 // pred_check_branch
        %612 = sbr.rel (%p610) target = $region68
      $region67: #{gvlinear_pallas.1} parent=5 // pred_region
        %s613 = ssub.s32 %s20, 2
        // Predicated region
        $region69: #{gvlinear_pallas.1} parent=67 // pred_check
          %p614 = pneg %p248
        $region70: #{gvlinear_pallas.1} parent=67 // pred_check_branch
          %616 = sbr.rel (%p614) target = $region72
        $region71: #{gvlinear_pallas.1} parent=67 // pred_region
          %s617 = sand.u32 %s233, 1
          %s618 = scalar_lea.sflag [#allocation3], %s617
          %s619 = sand.u32 %s233, 1
          %s620 = smul.addr %s619, 8
          %s621 = scalar_lea.vmem [#allocation2], %s620
          %623 = dma.done %s618, 128
        $region72: #{gvlinear_pallas.1} parent=67 // pred_fallthru
          _
        // Predicated region
        $region73: #{gvlinear_pallas.1} parent=67 // pred_check
          %p624 = pneg %p274
        $region74: #{gvlinear_pallas.1} parent=67 // pred_check_branch
          %626 = sbr.rel (%p624) target = $region76
        $region75: #{gvlinear_pallas.1} parent=67 // pred_region
          %p627 = scmp.lt.s32.totalorder %s26, 1
          %s628 = scalar_select %p627, %s26, 1
          %s629 = smul.addr %s628, 8
          %s630 = scalar_lea.vmem %s10, %s629
        $region76: #{gvlinear_pallas.1} parent=67 // pred_fallthru
          _
      $region68: #{gvlinear_pallas.1} parent=5 // pred_fallthru
        _
    $region6: #{gvlinear_pallas.1} parent=1 // loop_footer
      %s24 = sadd.s32 1, %s20
    $region7: #{gvlinear_pallas.1} parent=1 // loop_footer_branch
      %19 = sbr.rel target = $region3
    $region8: #{gvlinear_pallas.1} parent=1 // loop_exit
      _
    %631 = vsyncpa [#allocation3], 1
    %s632 = scalar_lea.sflag [#allocation3], 1
    %633 = vsyncpa %s632, 1

</llo_original>
